<compile_context>
chip_gen: v7x
topology: tpu7x:2x2x1
jax: 0.10.0
libtpu: 0.0.40
codegen_flags: <defaults>
</compile_context>

<pallas_src>
import jax
import jax.numpy as jnp
from jax.experimental import pallas as pl
from jax.experimental.pallas import tpu as pltpu


def _round_up(x, m):
    return ((x + m - 1) // m) * m


def _mlp_kernel(x_ref, wb_ref, w2_ref, w3_ref, b3_ref, o_ref):
    # Feature-major: x block is (1, TB) with the batch on the lane axis.
    x = x_ref[...]                                                       # (1, TB)

    # Packed fc1/fc2 column params, resident in VMEM across all grid steps.
    w1 = wb_ref[:, 0:1]                                                  # (H, 1)
    b1 = wb_ref[:, 1:2]                                                  # (H, 1)
    b2 = wb_ref[:, 2:3]                                                  # (H, 1)

    # fc1: K=1 contraction -> VPU broadcast-multiply (no MXU outer-product waste).
    h1 = jnp.maximum(w1 * x + b1, 0.0)                                   # (H, TB)

    # fc2: 40x40 GEMM on the MXU, f32 accumulation.
    h2 = jnp.dot(w2_ref[...], h1, preferred_element_type=jnp.float32)    # (H, TB)
    h2 = jnp.maximum(h2 + b2, 0.0)

    # fc3: (1,40) @ (40,TB) -> lane-dense (1, TB) output block.
    out = jnp.dot(w3_ref[...], h2, preferred_element_type=jnp.float32)   # (1, TB)
    o_ref[...] = (out + b3_ref[0, 0]).astype(o_ref.dtype)


def sinusoid_net_forward(x, params, *, batch_tile=32768):
    """x: (B, 1) float32.
    params: PyTorch-layout weights {w1:(40,1), w2:(40,40), w3:(1,40)} and column biases
    {b1:(40,1), b2:(40,1), b3:(1,1)}. Returns (B, 1) float32."""
    B, D_in = x.shape
    assert D_in == 1
    H = params["w2"].shape[0]          # 40
    D_out = params["w3"].shape[0]      # 1

    # Free relayout: (B, 1) and (1, B) share the same linear data layout.
    xt = x.reshape(D_in, B)

    # Batch tile on the lane axis: multiple of 128, large (overhead amortization),
    # but capped so the grid has >=2 steps when B allows it (v7x 2-TC megacore).
    TB = max(128, min(_round_up(batch_tile, 128), _round_up(pl.cdiv(B, 2), 128)))
    grid = (pl.cdiv(B, TB),)   # partial last block handled by Pallas masking

    # Pack the tiny (40,1) column params into one resident (H, 3) VMEM block.
    wb = jnp.concatenate([params["w1"], params["b1"], params["b2"]], axis=1)

    # Per-step VMEM footprint ~448*TB bytes (h1/h2 f32 temporaries + double-buffered,
    # sublane-padded (1,TB) I/O blocks).  Floor 32 MiB (v5e default is 16 MiB),
    # cap 64 MiB (v7x physical VMEM).
    est_step_vmem = 448 * TB + (64 << 10)
    vmem_limit = int(min(64 << 20, max(32 << 20, 2 * est_step_vmem)))

    weight_elems = H * D_in + H + H * H + H + D_out * H + D_out
    cost = pl.CostEstimate(
        flops=2 * B * (H * D_in + H * H + H * D_out),
        transcendentals=0,
        bytes_accessed=4 * (B * (D_in + D_out) + weight_elems),
    )

    out_t = pl.pallas_call(
        _mlp_kernel,
        out_shape=jax.ShapeDtypeStruct((D_out, B), jnp.float32),
        grid_spec=pltpu.PrefetchScalarGridSpec(
            num_scalar_prefetch=0,
            grid=grid,
            in_specs=[
                pl.BlockSpec((D_in, TB), lambda i: (0, i)),        # x batch tile (lane-dense)
                pl.BlockSpec((H, 3), lambda i: (0, 0)),            # packed [w1|b1|b2], resident
                pl.BlockSpec((H, H), lambda i: (0, 0)),            # w2 (40, 40), resident
                pl.BlockSpec((D_out, H), lambda i: (0, 0)),        # w3 (1, 40), resident
                pl.BlockSpec(memory_space=pltpu.MemorySpace.SMEM), # b3 scalar in SMEM
            ],
            out_specs=pl.BlockSpec((D_out, TB), lambda i: (0, i)),  # lane-dense output
        ),
        compiler_params=pltpu.CompilerParams(
            dimension_semantics=("parallel",),
            vmem_limit_bytes=vmem_limit,
        ),
        cost_estimate=cost,
    )(xt, wb, params["w2"], params["w3"], params["b3"])

    # Back to the PyTorch-facing (B, 1) layout (free reshape, no slice/transpose).
    return out_t.reshape(B, D_out)


def init_params(key):
    """Deterministic init mimicking nn.Linear default: U(-1/sqrt(fan_in), 1/sqrt(fan_in)).
    Weights kept in PyTorch (out, in) layout; biases stored as (out, 1) columns."""
    def linear_init(key, fan_in, fan_out):
        kw, kb = jax.random.split(key)
        bound = 1.0 / (fan_in ** 0.5)
        w = jax.random.uniform(kw, (fan_out, fan_in), jnp.float32, -bound, bound)
        b = jax.random.uniform(kb, (fan_out, 1), jnp.float32, -bound, bound)
        return w, b

    k1, k2, k3 = jax.random.split(key, 3)
    w1, b1 = linear_init(k1, 1, 40)
    w2, b2 = linear_init(k2, 40, 40)
    w3, b3 = linear_init(k3, 40, 1)
    return {"w1": w1, "b1": b1, "w2": w2, "b2": b2, "w3": w3, "b3": b3}


def reference_forward(x, p):
    h1 = jnp.maximum(x @ p["w1"].T + p["b1"].T, 0.0)
    h2 = jnp.maximum(h1 @ p["w2"].T + p["b2"].T, 0.0)
    return h2 @ p["w3"].T + p["b3"].T


if __name__ == "__main__":
    key = jax.random.PRNGKey(0)
    kp, kx = jax.random.split(key)
    params = init_params(kp)

    # Small, ragged batch: exercises the >=2-step grid and the partial-last-block
    # (masked store) path; sinusoid-regression style inputs.
    B = 200
    x = jax.random.uniform(kx, (B, 1), jnp.float32, -5.0, 5.0)

    out = sinusoid_net_forward(x, params)
    out = jax.block_until_ready(out)

    ref = reference_forward(x, params)
    assert out.shape == (B, 1)
    assert jnp.allclose(out, ref, atol=1e-5, rtol=1e-5), "mismatch vs JAX reference"
    print("KERNEL_OK")
</pallas_src>

<mosaic_0001>
module attributes {stable_mosaic.version = 11 : i64} {
  func.func @_mlp_kernel(%arg0: i32, %arg1: memref<1x128xf32, #tpu.memory_space<vmem>>, %arg2: memref<40x3xf32, #tpu.memory_space<vmem>>, %arg3: memref<40x40xf32, #tpu.memory_space<vmem>>, %arg4: memref<1x40xf32, #tpu.memory_space<vmem>>, %arg5: memref<1x1xf32, #tpu.memory_space<smem>>, %arg6: memref<1x128xf32, #tpu.memory_space<vmem>>) attributes {dimension_semantics = [#tpu.dimension_semantics<parallel>], iteration_bounds = array<i64: 2>, scalar_prefetch = 0 : i64, scratch_operands = 0 : i64, tpu.core_type = #tpu.core_type<tc>, window_params = [{transform_indices = @transform_0, window_bounds = array<i64: 1, 128>}, {pipeline_mode = #tpu.pipeline_mode<synchronous>, transform_indices = @transform_1, window_bounds = array<i64: 40, 3>}, {pipeline_mode = #tpu.pipeline_mode<synchronous>, transform_indices = @transform_2, window_bounds = array<i64: 40, 40>}, {pipeline_mode = #tpu.pipeline_mode<synchronous>, transform_indices = @transform_3, window_bounds = array<i64: 1, 40>}, {transform_indices = @transform_4, window_bounds = array<i64: 1, 1>}, {transform_indices = @transform_5, window_bounds = array<i64: 1, 128>}]} {
    %c0 = arith.constant 0 : index
    %c0_0 = arith.constant 0 : index
    %0 = vector.load %arg1[%c0, %c0_0] : memref<1x128xf32, #tpu.memory_space<vmem>>, vector<1x128xf32>
    %c0_1 = arith.constant 0 : index
    %c0_2 = arith.constant 0 : index
    %1 = vector.load %arg2[%c0_1, %c0_2] : memref<40x3xf32, #tpu.memory_space<vmem>>, vector<40x1xf32>
    %c0_3 = arith.constant 0 : index
    %c1 = arith.constant 1 : index
    %2 = vector.load %arg2[%c0_3, %c1] : memref<40x3xf32, #tpu.memory_space<vmem>>, vector<40x1xf32>
    %c0_4 = arith.constant 0 : index
    %c2 = arith.constant 2 : index
    %3 = vector.load %arg2[%c0_4, %c2] : memref<40x3xf32, #tpu.memory_space<vmem>>, vector<40x1xf32>
    %4 = vector.broadcast %1 : vector<40x1xf32> to vector<40x128xf32>
    %5 = vector.broadcast %0 : vector<1x128xf32> to vector<40x128xf32>
    %6 = arith.mulf %4, %5 : vector<40x128xf32>
    %7 = vector.broadcast %2 : vector<40x1xf32> to vector<40x128xf32>
    %8 = arith.addf %6, %7 : vector<40x128xf32>
    %cst = arith.constant 0.000000e+00 : f32
    %9 = vector.broadcast %cst : f32 to vector<40x128xf32>
    %10 = arith.maximumf %8, %9 : vector<40x128xf32>
    %c0_5 = arith.constant 0 : index
    %c0_6 = arith.constant 0 : index
    %11 = vector.load %arg3[%c0_5, %c0_6] : memref<40x40xf32, #tpu.memory_space<vmem>>, vector<40x40xf32>
    %cst_7 = arith.constant dense<0.000000e+00> : vector<40x128xf32>
    %12 = tpu.matmul %11, %10, %cst_7 {dimension_numbers = #tpu.dot_dimension_numbers<[1], [0], [0], [1], [0, 0, 1, 1], [], []>} : vector<40x40xf32>, vector<40x128xf32>, vector<40x128xf32> -> vector<40x128xf32>
    %13 = vector.broadcast %3 : vector<40x1xf32> to vector<40x128xf32>
    %14 = arith.addf %12, %13 : vector<40x128xf32>
    %cst_8 = arith.constant 0.000000e+00 : f32
    %15 = vector.broadcast %cst_8 : f32 to vector<40x128xf32>
    %16 = arith.maximumf %14, %15 : vector<40x128xf32>
    %c0_9 = arith.constant 0 : index
    %c0_10 = arith.constant 0 : index
    %17 = vector.load %arg4[%c0_9, %c0_10] : memref<1x40xf32, #tpu.memory_space<vmem>>, vector<1x40xf32>
    %cst_11 = arith.constant dense<0.000000e+00> : vector<1x128xf32>
    %18 = tpu.matmul %17, %16, %cst_11 {dimension_numbers = #tpu.dot_dimension_numbers<[1], [0], [0], [1], [0, 0, 1, 1], [], []>} : vector<1x40xf32>, vector<40x128xf32>, vector<1x128xf32> -> vector<1x128xf32>
    %c0_12 = arith.constant 0 : index
    %c0_13 = arith.constant 0 : index
    %19 = memref.load %arg5[%c0_12, %c0_13] : memref<1x1xf32, #tpu.memory_space<smem>>
    %20 = vector.broadcast %19 : f32 to vector<1x128xf32>
    %21 = arith.addf %18, %20 : vector<1x128xf32>
    %c0_14 = arith.constant 0 : index
    %c0_15 = arith.constant 0 : index
    %22 = vector.load %arg6[%c0_14, %c0_15] : memref<1x128xf32, #tpu.memory_space<vmem>>, vector<1x128xf32>
    tpu.vector_store %arg6[%c0_14, %c0_15], %21 {strides = array<i32>} : memref<1x128xf32, #tpu.memory_space<vmem>>, vector<1x128xf32>,
    return
  }
  func.func @transform_0(%arg0: i32) -> (i32, i32) {
    %c0_i32 = arith.constant 0 : i32
    %c0_i32_0 = arith.constant 0 : i32
    return %c0_i32, %arg0 : i32, i32
  }
  func.func @transform_1(%arg0: i32) -> (i32, i32) {
    %c0_i32 = arith.constant 0 : i32
    %c0_i32_0 = arith.constant 0 : i32
    %c0_i32_1 = arith.constant 0 : i32
    return %c0_i32, %c0_i32_0 : i32, i32
  }
  func.func @transform_2(%arg0: i32) -> (i32, i32) {
    %c0_i32 = arith.constant 0 : i32
    %c0_i32_0 = arith.constant 0 : i32
    %c0_i32_1 = arith.constant 0 : i32
    return %c0_i32, %c0_i32_0 : i32, i32
  }
  func.func @transform_3(%arg0: i32) -> (i32, i32) {
    %c0_i32 = arith.constant 0 : i32
    %c0_i32_0 = arith.constant 0 : i32
    %c0_i32_1 = arith.constant 0 : i32
    return %c0_i32, %c0_i32_0 : i32, i32
  }
  func.func @transform_4(%arg0: i32) -> (i32, i32) {
    %c0_i32 = arith.constant 0 : i32
    %c0_i32_0 = arith.constant 0 : i32
    %c0_i32_1 = arith.constant 0 : i32
    return %c0_i32, %c0_i32_0 : i32, i32
  }
  func.func @transform_5(%arg0: i32) -> (i32, i32) {
    %c0_i32 = arith.constant 0 : i32
    %c0_i32_0 = arith.constant 0 : i32
    return %c0_i32, %arg0 : i32, i32
  }
}

</mosaic_0001>

<llo_original>
// kernel: tpu_custom_call.1
$region0: #{tpu_custom_call.1}
  #allocation0 [shape = 'u32[]', space=smem, size = 0x4, offset = 0x4, fixed_abs, tag = 'smem constant byte address 0x4 - core index']
  #allocation1 [shape = 'u32[144,128]{1,0:T(1,128)}', space=vmem, size = 0x12000, scoped, tag = 'internal scratch']
  #allocation2 [shape = 'f32[1,1]{1,0:T(1,128)S(6)}', space=smem, size = 0x200, scoped, tag = 'scoped memory for tpu_custom_call.1']
  %s0 = inlined_call_operand.vmem [shape: f32[1,200], index: 0, kind: input, shape index: {}]
  %s1 = inlined_call_operand.vmem [shape: f32[40,3], index: 1, kind: input, shape index: {}]
  %s2 = inlined_call_operand.vmem [shape: f32[40,40], index: 2, kind: input, shape index: {}]
  %s3 = inlined_call_operand.vmem [shape: f32[1,40], index: 3, kind: input, shape index: {}]
  %s4 = inlined_call_operand.<no memory space> [shape: f32[1,1], index: 4, kind: input, shape index: {}]
  %s5 = inlined_call_operand.hbm [shape: f32[1,200], index: 5, kind: output, shape index: {}]
  %s6 = sld [smem:[#allocation0]]
  $region53: #{tpu_custom_call.1} parent=0
    _
  %s8 = ssub.s32 1, %s6
  %s9 = scalar_select 0, %s8, %s6
  %10 = sst [smem:[#allocation2]] %s4
  $region1: #{tpu_custom_call.1} parent=0
    #allocation3 [shape = 'u8[1024]{0}', space=vmem, size = 0x400, scoped, tag = 'output window, operand 0']
    #allocation4 [shape = 's32[2]{0}', space=sflag, size = 0x8, scoped, tag = 'scoped memory for tpu_custom_call.1']
    %11 = vsyncpa [#allocation4], 0
    %s12 = scalar_lea.sflag [#allocation4], 1
    %13 = vsyncpa %s12, 0
    loop: start=0, step=1, limit=4
    $region2: #{tpu_custom_call.1} parent=1 // loop_pre_header
      _
    $region3: #{tpu_custom_call.1} parent=1 // loop_header
      %s15 = sphi 0, %s19
      %p16 = scmp.ge.s32.totalorder %s15, 4
      %s25 = sphi 0, %s27
      %s28 = sphi 0, %s25
      %s29 = sphi 0, %s28
      %s45 = sphi 0, %s29
      %s49 = sphi 0, %s49
      %s51 = sphi 0, %s49
      %s52 = sphi 0, %s51
      %s66 = sphi 0, %s52
      %s70 = sphi 0, %s70
      %s72 = sphi 0, %s70
      %s73 = sphi 0, %s72
      %s87 = sphi 0, %s73
      %s91 = sphi 0, %s91
      %s93 = sphi 0, %s91
      %s94 = sphi 0, %s93
      %s108 = sphi 0, %s94
      %s112 = sphi 0, %s112
      %s114 = sphi 0, %s112
      %s115 = sphi 0, %s114
      %s129 = sphi 0, %s115
      %s135 = sphi 0, %s137
      %s138 = sphi 0, %s135
      %s139 = sphi 0, %s138
      %s155 = sphi 0, %s139
    $region4: #{tpu_custom_call.1} parent=1 // loop_header_branch
      %18 = sbr.rel (%p16) target = $region8
    $region5: #{tpu_custom_call.1} parent=1 // loop_body
      %s20 = ssub.s32 %s15, 1
      %s21 = ssub.s32 %s15, 2
      %s22 = sadd.s32 %s15, 1
      %s23 = ssub.s32 %s15, %s22
      %p24 = scmp.eq.s32.totalorder %s23, 0
      %s26 = sadd.s32 %s25, 1
      %s27 = scalar_select %p24, %s25, %s26
      %p30 = pneg %p24
      %p31 = scmp.eq.s32.totalorder %s15, 1
      %p32 = por %p30, %p31
      %p33 = scmp.ne.s32.totalorder %s25, %s28
      %p34 = scmp.eq.s32.totalorder %s15, 0
      %p35 = por %p33, %p34
      %p36 = scmp.ne.s32.totalorder %s25, %s28
      %p37 = scmp.eq.s32.totalorder %s20, 1
      %p38 = por %p36, %p37
      %p39 = scmp.ne.s32.totalorder %s28, %s29
      %p40 = scmp.eq.s32.totalorder %s20, 0
      %p41 = por %p39, %p40
      %p42 = scmp.ne.s32.totalorder %s28, %s29
      %p43 = scmp.eq.s32.totalorder %s21, 1
      %p44 = por %p42, %p43
      %p46 = scmp.ne.s32.totalorder %s29, %s45
      %p47 = scmp.eq.s32.totalorder %s21, 0
      %p48 = por %p46, %p47
      %s50 = sadd.s32 %s49, 1
      %p53 = scmp.eq.s32.totalorder %s15, 1
      %p54 = scmp.ne.s32.totalorder %s49, %s51
      %p55 = scmp.eq.s32.totalorder %s15, 0
      %p56 = por %p54, %p55
      %p57 = scmp.ne.s32.totalorder %s49, %s51
      %p58 = scmp.eq.s32.totalorder %s20, 1
      %p59 = por %p57, %p58
      %p60 = scmp.ne.s32.totalorder %s51, %s52
      %p61 = scmp.eq.s32.totalorder %s20, 0
      %p62 = por %p60, %p61
      %p63 = scmp.ne.s32.totalorder %s51, %s52
      %p64 = scmp.eq.s32.totalorder %s21, 1
      %p65 = por %p63, %p64
      %p67 = scmp.ne.s32.totalorder %s52, %s66
      %p68 = scmp.eq.s32.totalorder %s21, 0
      %p69 = por %p67, %p68
      %s71 = sadd.s32 %s70, 1
      %p74 = scmp.eq.s32.totalorder %s15, 1
      %p75 = scmp.ne.s32.totalorder %s70, %s72
      %p76 = scmp.eq.s32.totalorder %s15, 0
      %p77 = por %p75, %p76
      %p78 = scmp.ne.s32.totalorder %s70, %s72
      %p79 = scmp.eq.s32.totalorder %s20, 1
      %p80 = por %p78, %p79
      %p81 = scmp.ne.s32.totalorder %s72, %s73
      %p82 = scmp.eq.s32.totalorder %s20, 0
      %p83 = por %p81, %p82
      %p84 = scmp.ne.s32.totalorder %s72, %s73
      %p85 = scmp.eq.s32.totalorder %s21, 1
      %p86 = por %p84, %p85
      %p88 = scmp.ne.s32.totalorder %s73, %s87
      %p89 = scmp.eq.s32.totalorder %s21, 0
      %p90 = por %p88, %p89
      %s92 = sadd.s32 %s91, 1
      %p95 = scmp.eq.s32.totalorder %s15, 1
      %p96 = scmp.ne.s32.totalorder %s91, %s93
      %p97 = scmp.eq.s32.totalorder %s15, 0
      %p98 = por %p96, %p97
      %p99 = scmp.ne.s32.totalorder %s91, %s93
      %p100 = scmp.eq.s32.totalorder %s20, 1
      %p101 = por %p99, %p100
      %p102 = scmp.ne.s32.totalorder %s93, %s94
      %p103 = scmp.eq.s32.totalorder %s20, 0
      %p104 = por %p102, %p103
      %p105 = scmp.ne.s32.totalorder %s93, %s94
      %p106 = scmp.eq.s32.totalorder %s21, 1
      %p107 = por %p105, %p106
      %p109 = scmp.ne.s32.totalorder %s94, %s108
      %p110 = scmp.eq.s32.totalorder %s21, 0
      %p111 = por %p109, %p110
      %s113 = sadd.s32 %s112, 1
      %p116 = scmp.eq.s32.totalorder %s15, 1
      %p117 = scmp.ne.s32.totalorder %s112, %s114
      %p118 = scmp.eq.s32.totalorder %s15, 0
      %p119 = por %p117, %p118
      %p120 = scmp.ne.s32.totalorder %s112, %s114
      %p121 = scmp.eq.s32.totalorder %s20, 1
      %p122 = por %p120, %p121
      %p123 = scmp.ne.s32.totalorder %s114, %s115
      %p124 = scmp.eq.s32.totalorder %s20, 0
      %p125 = por %p123, %p124
      %p126 = scmp.ne.s32.totalorder %s114, %s115
      %p127 = scmp.eq.s32.totalorder %s21, 1
      %p128 = por %p126, %p127
      %p130 = scmp.ne.s32.totalorder %s115, %s129
      %p131 = scmp.eq.s32.totalorder %s21, 0
      %p132 = por %p130, %p131
      %s133 = ssub.s32 %s15, %s22
      %p134 = scmp.eq.s32.totalorder %s133, 0
      %s136 = sadd.s32 %s135, 1
      %s137 = scalar_select %p134, %s135, %s136
      %p140 = pneg %p134
      %p141 = scmp.eq.s32.totalorder %s15, 1
      %p142 = por %p140, %p141
      %p143 = scmp.ne.s32.totalorder %s135, %s138
      %p144 = scmp.eq.s32.totalorder %s15, 0
      %p145 = por %p143, %p144
      %p146 = scmp.ne.s32.totalorder %s135, %s138
      %p147 = scmp.eq.s32.totalorder %s20, 1
      %p148 = por %p146, %p147
      %p149 = scmp.ne.s32.totalorder %s138, %s139
      %p150 = scmp.eq.s32.totalorder %s20, 0
      %p151 = por %p149, %p150
      %p152 = scmp.ne.s32.totalorder %s138, %s139
      %p153 = scmp.eq.s32.totalorder %s21, 1
      %p154 = por %p152, %p153
      %p156 = scmp.ne.s32.totalorder %s139, %s155
      %p157 = scmp.eq.s32.totalorder %s21, 0
      %p158 = por %p156, %p157
      %p159 = scmp.le.s32.totalorder 1, %s15
      %p160 = scmp.lt.s32.totalorder %s15, 3
      %p161 = pnand %p159, %p160
      %p162 = pneg %p161
      // Predicated region
      $region9: #{tpu_custom_call.1} parent=5 // pred_check
        _
      $region10: #{tpu_custom_call.1} parent=5 // pred_check_branch
        %164 = sbr.rel (%p161) target = $region12
      $region11: #{tpu_custom_call.1} parent=5 // pred_region
        %s165 = ssub.s32 %s15, 1
        // Predicated region
        $region13: #{tpu_custom_call.1} parent=11 // pred_check
          %p166 = pneg %p62
        $region14: #{tpu_custom_call.1} parent=11 // pred_check_branch
          %168 = sbr.rel (%p166) target = $region16
        $region15: #{tpu_custom_call.1} parent=11 // pred_region
          _
        $region16: #{tpu_custom_call.1} parent=11 // pred_fallthru
          _
        // Predicated region
        $region17: #{tpu_custom_call.1} parent=11 // pred_check
          %p169 = pneg %p83
        $region18: #{tpu_custom_call.1} parent=11 // pred_check_branch
          %171 = sbr.rel (%p169) target = $region20
        $region19: #{tpu_custom_call.1} parent=11 // pred_region
          _
        $region20: #{tpu_custom_call.1} parent=11 // pred_fallthru
          _
        // Predicated region
        $region21: #{tpu_custom_call.1} parent=11 // pred_check
          %p172 = pneg %p104
        $region22: #{tpu_custom_call.1} parent=11 // pred_check_branch
          %174 = sbr.rel (%p172) target = $region24
        $region23: #{tpu_custom_call.1} parent=11 // pred_region
          _
        $region24: #{tpu_custom_call.1} parent=11 // pred_fallthru
          _
        // Predicated region
        $region25: #{tpu_custom_call.1} parent=11 // pred_check
          %p175 = pneg %p125
        $region26: #{tpu_custom_call.1} parent=11 // pred_check_branch
          %177 = sbr.rel (%p175) target = $region28
        $region27: #{tpu_custom_call.1} parent=11 // pred_region
          _
        $region28: #{tpu_custom_call.1} parent=11 // pred_fallthru
          _
      $region12: #{tpu_custom_call.1} parent=5 // pred_fallthru
        _
      %p178 = scmp.lt.s32.totalorder %s15, 2
      // Predicated region
      $region29: #{tpu_custom_call.1} parent=5 // pred_check
        %p179 = pneg %p178
      $region30: #{tpu_custom_call.1} parent=5 // pred_check_branch
        %181 = sbr.rel (%p179) target = $region32
      $region31: #{tpu_custom_call.1} parent=5 // pred_region
        // Predicated region
        $region33: #{tpu_custom_call.1} parent=31 // pred_check
          %p182 = pneg %p35
        $region34: #{tpu_custom_call.1} parent=31 // pred_check_branch
          %184 = sbr.rel (%p182) target = $region36
        $region35: #{tpu_custom_call.1} parent=31 // pred_region
          %p185 = scmp.lt.s32.totalorder %s15, 1
          %s186 = scalar_select %p185, %s15, 1
          %s187 = scalar_lea.vmem %s0, %s186
        $region36: #{tpu_custom_call.1} parent=31 // pred_fallthru
          _
      $region32: #{tpu_custom_call.1} parent=5 // pred_fallthru
        _
      %p188 = scmp.le.s32.totalorder 1, %s15
      %p189 = scmp.lt.s32.totalorder %s15, 3
      %p190 = pnand %p188, %p189
      %p191 = pneg %p190
      // Predicated region
      $region37: #{tpu_custom_call.1} parent=5 // pred_check
        _
      $region38: #{tpu_custom_call.1} parent=5 // pred_check_branch
        %193 = sbr.rel (%p190) target = $region40
      $region39: #{tpu_custom_call.1} parent=5 // pred_region
        %s194 = ssub.s32 %s15, 1
        %p195 = scmp.lt.s32.totalorder %s20, 1
        %s196 = scalar_select %p195, %s20, 1
        %s197 = scalar_lea.vmem %s0, %s196
        %p198 = pneg %p41
        %p199 = pneg %p38
        %p200 = pneg %p62
        %p201 = pneg %p59
        %p202 = pneg %p83
        %p203 = pneg %p80
        %p204 = pneg %p104
        %p205 = pneg %p101
        %p206 = pneg %p125
        %p207 = pneg %p122
        %p208 = pneg %p151
        %p209 = pneg %p148
        %s210 = sand.u32 %s138, 1
        %s211 = scalar_lea.sflag [#allocation4], %s210
        %s212 = sand.u32 %s138, 1
        %s213 = scalar_lea.vmem [#allocation3], %s212
        %p214 = scmp.lt.s32.totalorder %s20, 1
        %s215 = scalar_select %p214, %s20, 1
        %s216 = scalar_lea.vmem %s0, %s215
        %v217 = vld [vmem:[%s216] sm:$0x1]
        %v218 = vld [vmem:[%s1] sm:$0xff]
        %v219 = vld [vmem:[%s1 + $0x8] sm:$0xff]
        %v220 = vld [vmem:[%s1 + $0x10] sm:$0xff]
        %v221 = vld [vmem:[%s1 + $0x18] sm:$0xff]
        %v222 = vld [vmem:[%s1 + $0x20] sm:$0xff]
        %224 = vset.pattern.permute.xlu0 0
        %225 = vperm.xlu0 %224, %v218
        %v226 = vpop.permute.xlu0 %225
        %229 = vset.pattern.permute.xlu0 0
        %230 = vperm.xlu0 %229, %v219
        %v231 = vpop.permute.xlu0 %230
        %234 = vset.pattern.permute.xlu0 0
        %235 = vperm.xlu0 %234, %v220
        %v236 = vpop.permute.xlu0 %235
        %239 = vset.pattern.permute.xlu0 0
        %240 = vperm.xlu0 %239, %v221
        %v241 = vpop.permute.xlu0 %240
        %244 = vset.pattern.permute.xlu0 0
        %245 = vperm.xlu0 %244, %v222
        %v246 = vpop.permute.xlu0 %245
        %v249 = vlaneseq
        %v250 = vshrl.u32 %v249, 7
        %v251 = vsub.s32 0, %v250
        %v252 = vrot.slane %v217, %v251
        %v254 = vmul.f32 %v226, %v252
        %v255 = vmul.f32 %v231, %v252
        %v256 = vmul.f32 %v236, %v252
        %v257 = vmul.f32 %v241, %v252
        %v258 = vmul.f32 %v246, %v252
        %259 = vset.pattern.permute.xlu0 1
        %260 = vperm.xlu0 %259, %v218
        %v261 = vpop.permute.xlu0 %260
        %263 = vset.pattern.permute.xlu0 1
        %264 = vperm.xlu0 %263, %v219
        %v265 = vpop.permute.xlu0 %264
        %267 = vset.pattern.permute.xlu0 1
        %268 = vperm.xlu0 %267, %v220
        %v269 = vpop.permute.xlu0 %268
        %271 = vset.pattern.permute.xlu0 1
        %272 = vperm.xlu0 %271, %v221
        %v273 = vpop.permute.xlu0 %272
        %275 = vset.pattern.permute.xlu0 1
        %276 = vperm.xlu0 %275, %v222
        %v277 = vpop.permute.xlu0 %276
        %v279 = vadd.f32 %v254, %v261
        %v280 = vadd.f32 %v255, %v265
        %v281 = vadd.f32 %v256, %v269
        %v282 = vadd.f32 %v257, %v273
        %v283 = vadd.f32 %v258, %v277
        %v284 = vmax.f32 %v279, 0.0
        %v285 = vmax.f32 %v280, 0.0
        %v286 = vmax.f32 %v281, 0.0
        %v287 = vmax.f32 %v282, 0.0
        %v288 = vmax.f32 %v283, 0.0
        %v289 = vld [vmem:[%s2] sm:$0xff]
        %v290 = vld [vmem:[%s2 + $0x8] sm:$0xff]
        %v291 = vld [vmem:[%s2 + $0x10] sm:$0xff]
        %v292 = vld [vmem:[%s2 + $0x18] sm:$0xff]
        %v293 = vld [vmem:[%s2 + $0x20] sm:$0xff]
        %294 = vset.pattern.permute.xlu0 2
        %295 = vperm.xlu0 %294, %v218
        %v296 = vpop.permute.xlu0 %295
        %298 = vset.pattern.permute.xlu0 2
        %299 = vperm.xlu0 %298, %v219
        %v300 = vpop.permute.xlu0 %299
        %302 = vset.pattern.permute.xlu0 2
        %303 = vperm.xlu0 %302, %v220
        %v304 = vpop.permute.xlu0 %303
        %306 = vset.pattern.permute.xlu0 2
        %307 = vperm.xlu0 %306, %v221
        %v308 = vpop.permute.xlu0 %307
        %310 = vset.pattern.permute.xlu0 2
        %311 = vperm.xlu0 %310, %v222
        %v312 = vpop.permute.xlu0 %311
        %vm314 = vcmask 326656
        %v316 = vsel %vm314, %v289, 0
        %v319 = vsel %vm314, %v290, 0
        %v322 = vsel %vm314, %v291, 0
        %v325 = vsel %vm314, %v292, 0
        %v328 = vsel %vm314, %v293, 0
        %330 = vmatprep.subr.mxu0 0.0
        %331 = vmatpush1.msra.mxu0 %v284
        %332 = vmatprep.subr.mxu0 0.0
        %333 = vmatpush1.msra.mxu0 %v285
        %334 = vmatprep.subr.mxu0 0.0
        %335 = vmatpush1.msra.mxu0 %v286
        %336 = vmatprep.subr.mxu0 0.0
        %337 = vmatpush1.msra.mxu0 %v287
        %338 = vmatprep.subr.mxu0 0.0
        %339 = vmatpush1.msra.mxu0 %v288
        %340 = vmatprep.subr.mxu0 0.0
        %341 = vmatpush1.msra.mxu0 0.0
        %342 = vmatprep.subr.mxu0 0.0
        %343 = vmatpush1.msra.mxu0 0.0
        %344 = vmatprep.subr.mxu0 0.0
        %345 = vmatpush1.msra.mxu0 0.0
        %346 = vmatprep.subr.mxu0 0.0
        %347 = vmatpush1.msra.mxu0 0.0
        %348 = vmatprep.subr.mxu0 0.0
        %349 = vmatpush1.msra.mxu0 0.0
        %350 = vmatprep.subr.mxu0 0.0
        %351 = vmatpush1.msra.mxu0 0.0
        %352 = vmatprep.subr.mxu0 0.0
        %353 = vmatpush1.msra.mxu0 0.0
        %354 = vmatprep.subr.mxu0 0.0
        %355 = vmatpush1.msra.mxu0 0.0
        %356 = vmatprep.subr.mxu0 0.0
        %357 = vmatpush1.msra.mxu0 0.0
        %358 = vmatprep.subr.mxu0 0.0
        %359 = vmatpush1.msra.mxu0 0.0
        %360 = vmatprep.subr.mxu0 0.0
        %361 = vmatpush1.msra.mxu0 0.0
        %362 = vmatprep.subr.mxu0 0.0
        %363 = vmatpush1.msra.mxu0 0.0
        %364 = vmatprep.subr.mxu0 0.0
        %365 = vmatpush1.msra.mxu0 0.0
        %366 = vmatprep.subr.mxu0 0.0
        %367 = vmatpush1.msra.mxu0 0.0
        %368 = vmatprep.subr.mxu0 0.0
        %369 = vmatpush1.msra.mxu0 0.0
        %370 = vmatprep.subr.mxu0 0.0
        %371 = vmatpush1.msra.mxu0 0.0
        %372 = vmatprep.subr.mxu0 0.0
        %373 = vmatpush1.msra.mxu0 0.0
        %374 = vmatprep.subr.mxu0 0.0
        %375 = vmatpush1.msra.mxu0 0.0
        %376 = vmatprep.subr.mxu0 0.0
        %377 = vmatpush1.msra.mxu0 0.0
        %378 = vmatprep.subr.mxu0 0.0
        %379 = vmatpush1.msra.mxu0 0.0
        %380 = vmatprep.subr.mxu0 0.0
        %381 = vmatpush1.msra.mxu0 0.0
        %382 = vmatprep.subr.mxu0 0.0
        %383 = vmatpush1.msra.mxu0 0.0
        %384 = vmatprep.subr.mxu0 0.0
        %385 = vmatpush1.msra.mxu0 0.0
        %386 = vmatprep.subr.mxu0 0.0
        %387 = vmatpush1.msra.mxu0 0.0
        %388 = vmatprep.subr.mxu0 0.0
        %389 = vmatpush1.msra.mxu0 0.0
        %390 = vmatprep.subr.mxu0 0.0
        %391 = vmatpush1.msra.mxu0 0.0
        %392 = vmatprep.subr.mxu0 0.0
        %393 = vmatpush1.msra.mxu0 0.0
        %394 = vmatprep.mubr.f32.mxu0 0.0
        %395 = vmatmul.mubr.f32.gmra.mrb[0].mxu0 %v316
        %v396 = vpop.f32.mrb[0].mxu0
        %v397 = vadd.f32 %v296, %v396
        %v398 = vpop.f32.mrb[0].mxu0
        %399 = vmatprep.mubr.f32.mxu0 0.0
        %400 = vmatmul.mubr.f32.gmra.mrb[0].mxu0 %v319
        %v401 = vpop.f32.mrb[0].mxu0
        %v402 = vadd.f32 %v300, %v401
        %v403 = vpop.f32.mrb[0].mxu0
        %404 = vmatprep.mubr.f32.mxu0 0.0
        %405 = vmatmul.mubr.f32.gmra.mrb[0].mxu0 %v322
        %v406 = vpop.f32.mrb[0].mxu0
        %v407 = vadd.f32 %v304, %v406
        %v408 = vpop.f32.mrb[0].mxu0
        %409 = vmatprep.mubr.f32.mxu0 0.0
        %410 = vmatmul.mubr.f32.gmra.mrb[0].mxu0 %v325
        %v411 = vpop.f32.mrb[0].mxu0
        %v412 = vadd.f32 %v308, %v411
        %v413 = vpop.f32.mrb[0].mxu0
        %414 = vmatprep.mubr.f32.mxu0 0.0
        %415 = vmatmul.mubr.f32.gmra.mrb[0].mxu0 %v328
        %v416 = vpop.f32.mrb[0].mxu0
        %v417 = vadd.f32 %v312, %v416
        %v418 = vpop.f32.mrb[0].mxu0
        %419 = vdwg.mxu0
        %v420 = vmax.f32 %v397, 0.0
        %v421 = vmax.f32 %v402, 0.0
        %v422 = vmax.f32 %v407, 0.0
        %v423 = vmax.f32 %v412, 0.0
        %v424 = vmax.f32 %v417, 0.0
        %v425 = vld [vmem:[%s3] sm:$0x1]
        %s426 = sld [smem:[#allocation2]]
        %v427 = vstv %s426
        %v429 = vsel %vm314, %v425, 0
        %431 = vmatprep.subr.mxu0 0.0
        %432 = vmatpush1.msra.mxu0 %v420
        %433 = vmatprep.subr.mxu0 0.0
        %434 = vmatpush1.msra.mxu0 %v421
        %435 = vmatprep.subr.mxu0 0.0
        %436 = vmatpush1.msra.mxu0 %v422
        %437 = vmatprep.subr.mxu0 0.0
        %438 = vmatpush1.msra.mxu0 %v423
        %439 = vmatprep.subr.mxu0 0.0
        %440 = vmatpush1.msra.mxu0 %v424
        %441 = vmatprep.subr.mxu0 0.0
        %442 = vmatpush1.msra.mxu0 0.0
        %443 = vmatprep.subr.mxu0 0.0
        %444 = vmatpush1.msra.mxu0 0.0
        %445 = vmatprep.subr.mxu0 0.0
        %446 = vmatpush1.msra.mxu0 0.0
        %447 = vmatprep.subr.mxu0 0.0
        %448 = vmatpush1.msra.mxu0 0.0
        %449 = vmatprep.subr.mxu0 0.0
        %450 = vmatpush1.msra.mxu0 0.0
        %451 = vmatprep.subr.mxu0 0.0
        %452 = vmatpush1.msra.mxu0 0.0
        %453 = vmatprep.subr.mxu0 0.0
        %454 = vmatpush1.msra.mxu0 0.0
        %455 = vmatprep.subr.mxu0 0.0
        %456 = vmatpush1.msra.mxu0 0.0
        %457 = vmatprep.subr.mxu0 0.0
        %458 = vmatpush1.msra.mxu0 0.0
        %459 = vmatprep.subr.mxu0 0.0
        %460 = vmatpush1.msra.mxu0 0.0
        %461 = vmatprep.subr.mxu0 0.0
        %462 = vmatpush1.msra.mxu0 0.0
        %463 = vmatprep.subr.mxu0 0.0
        %464 = vmatpush1.msra.mxu0 0.0
        %465 = vmatprep.subr.mxu0 0.0
        %466 = vmatpush1.msra.mxu0 0.0
        %467 = vmatprep.subr.mxu0 0.0
        %468 = vmatpush1.msra.mxu0 0.0
        %469 = vmatprep.subr.mxu0 0.0
        %470 = vmatpush1.msra.mxu0 0.0
        %471 = vmatprep.subr.mxu0 0.0
        %472 = vmatpush1.msra.mxu0 0.0
        %473 = vmatprep.subr.mxu0 0.0
        %474 = vmatpush1.msra.mxu0 0.0
        %475 = vmatprep.subr.mxu0 0.0
        %476 = vmatpush1.msra.mxu0 0.0
        %477 = vmatprep.subr.mxu0 0.0
        %478 = vmatpush1.msra.mxu0 0.0
        %479 = vmatprep.subr.mxu0 0.0
        %480 = vmatpush1.msra.mxu0 0.0
        %481 = vmatprep.subr.mxu0 0.0
        %482 = vmatpush1.msra.mxu0 0.0
        %483 = vmatprep.subr.mxu0 0.0
        %484 = vmatpush1.msra.mxu0 0.0
        %485 = vmatprep.subr.mxu0 0.0
        %486 = vmatpush1.msra.mxu0 0.0
        %487 = vmatprep.subr.mxu0 0.0
        %488 = vmatpush1.msra.mxu0 0.0
        %489 = vmatprep.subr.mxu0 0.0
        %490 = vmatpush1.msra.mxu0 0.0
        %491 = vmatprep.subr.mxu0 0.0
        %492 = vmatpush1.msra.mxu0 0.0
        %493 = vmatprep.subr.mxu0 0.0
        %494 = vmatpush1.msra.mxu0 0.0
        %495 = vmatprep.mubr.f32.mxu0 0.0
        %496 = vmatmul.mubr.f32.gmra.mrb[0].mxu0 %v429
        %v497 = vpop.f32.mrb[0].mxu0
        %v498 = vadd.f32 %v427, %v497
        %v499 = vpop.f32.mrb[0].mxu0
        %500 = vdwg.mxu0
        %501 = vst [vmem:[%s213] sm:$0x1] %v498
        %s502 = sand.u32 %s138, 1
        %s503 = scalar_lea.sflag [#allocation4], %s502
        %s504 = sand.u32 %s138, 1
        %s505 = scalar_lea.vmem [#allocation3], %s504
        // Predicated region
        $region41: #{tpu_custom_call.1} parent=39 // pred_check
          %p506 = pneg %p148
        $region42: #{tpu_custom_call.1} parent=39 // pred_check_branch
          %508 = sbr.rel (%p506) target = $region44
        $region43: #{tpu_custom_call.1} parent=39 // pred_region
          %s510 = ssub.s32 16, 16
          %511 = vsyncadd %s503, %s510
          %s512 = smul.addr %s20, 16
          %s513 = scalar_lea.hbm %s5, %s512
          %s515 = sshll.u32 %s505, 4
          %s516 = int_to_ptr.vmem [resolvable:$true] %s515
          %518 = dma.vmem_to_hbm [thread:$0]  %s516, 16, %s513, %s503
        $region44: #{tpu_custom_call.1} parent=39 // pred_fallthru
          _
      $region40: #{tpu_custom_call.1} parent=5 // pred_fallthru
        _
      %p519 = scmp.le.s32.totalorder 2, %s15
      // Predicated region
      $region45: #{tpu_custom_call.1} parent=5 // pred_check
        %p520 = pneg %p519
      $region46: #{tpu_custom_call.1} parent=5 // pred_check_branch
        %522 = sbr.rel (%p520) target = $region48
      $region47: #{tpu_custom_call.1} parent=5 // pred_region
        %s523 = ssub.s32 %s15, 2
        // Predicated region
        $region49: #{tpu_custom_call.1} parent=47 // pred_check
          %p524 = pneg %p154
        $region50: #{tpu_custom_call.1} parent=47 // pred_check_branch
          %526 = sbr.rel (%p524) target = $region52
        $region51: #{tpu_custom_call.1} parent=47 // pred_region
          %s527 = sand.u32 %s139, 1
          %s528 = scalar_lea.sflag [#allocation4], %s527
          %s529 = sand.u32 %s139, 1
          %s530 = scalar_lea.vmem [#allocation3], %s529
          %531 = dma.done %s528, 16
        $region52: #{tpu_custom_call.1} parent=47 // pred_fallthru
          _
      $region48: #{tpu_custom_call.1} parent=5 // pred_fallthru
        _
    $region6: #{tpu_custom_call.1} parent=1 // loop_footer
      %s19 = sadd.s32 1, %s15
    $region7: #{tpu_custom_call.1} parent=1 // loop_footer_branch
      %14 = sbr.rel target = $region3
    $region8: #{tpu_custom_call.1} parent=1 // loop_exit
      _
    %532 = vsyncpa [#allocation4], 1
    %s533 = scalar_lea.sflag [#allocation4], 1
    %534 = vsyncpa %s533, 1

</llo_original>
